<compile_context>
chip_gen: v6e
topology: v6e:2x2x1
jax: 0.10.0
libtpu: 0.0.40
codegen_flags: <defaults>
</compile_context>

<pallas_src>
import functools

import jax
import jax.numpy as jnp
from jax.experimental import pallas as pl
from jax.experimental.pallas import tpu as pltpu


def _round_up(x, m):
    return ((x + m - 1) // m) * m


def _textmlp_kernel(counts_ref, emb_ref, w1_ref, b1_ref, w2_ref, b2_ref,
                    out_ref, *, inv_s):
    # counts_ref: (TB, V) bf16     emb_ref: (V, D) bf16
    # w1_ref:     (D, H)  bf16     b1_ref:  (1, H) f32
    # w2_ref:     (H, CP) bf16     b2_ref:  (1, CP) f32 (-1e30 in padded cols)
    # out_ref:    (TB, CP) f32
    counts = counts_ref[...]                                        # (TB, V)

    # Mean pooling over the sequence as a matmul: (counts @ E) / S.
    pooled = jnp.dot(counts, emb_ref[...],
                     preferred_element_type=jnp.float32) * inv_s    # (TB, D) f32

    # fc1 + ReLU (dropout is identity in inference mode).
    h = jnp.dot(pooled.astype(jnp.bfloat16), w1_ref[...],
                preferred_element_type=jnp.float32) + b1_ref[...]   # (TB, H)
    h = jnp.maximum(h, 0.0)

    # fc2; padded class columns get bias -1e30 -> exp underflows to 0.
    logits = jnp.dot(h.astype(jnp.bfloat16), w2_ref[...],
                     preferred_element_type=jnp.float32) + b2_ref[...]  # (TB, CP)

    # Softmax over the class axis.
    m = jnp.max(logits, axis=-1, keepdims=True)
    e = jnp.exp(logits - m)
    denom = jnp.sum(e, axis=-1, keepdims=True)
    out_ref[...] = e * pl.reciprocal(denom, approx=True)


def textmlp_forward(input_ids, emb_table, w1, b1, w2, b2, *, tb=256):
    """input_ids: (B, S) int32; returns (B, num_classes) float32."""
    B, S = input_ids.shape
    V, D = emb_table.shape
    H = w1.shape[1]
    C = w2.shape[1]
    CP = _round_up(max(C, 1), 128)          # lane-dense padded class dim

    # --- wrapper-side prep (tiny tensors; no (B, S, D) materialization) ----
    # Token-count matrix: counts[b, v] = #occurrences of token v in row b.
    counts = jnp.sum(jax.nn.one_hot(input_ids, V, dtype=jnp.float32), axis=1)

    # Batch tiling: TB a multiple of 8, B padded to a multiple of TB.
    TB = min(tb, _round_up(B, 8))
    B_pad = _round_up(B, TB)
    if B_pad != B:
        counts = jnp.pad(counts, ((0, B_pad - B), (0, 0)))
    counts = counts.astype(jnp.bfloat16)     # small integer counts: exact in bf16

    emb_bf16 = emb_table.astype(jnp.bfloat16)
    w1_bf16 = w1.astype(jnp.bfloat16)
    b1_2d = b1.astype(jnp.float32).reshape(1, H)

    # Pad fc2 to CP columns; padded bias columns -> -1e30 so softmax ignores them.
    w2_pad = jnp.zeros((H, CP), jnp.bfloat16).at[:, :C].set(w2.astype(jnp.bfloat16))
    b2_pad = jnp.full((1, CP), -1e30, jnp.float32).at[:, :C].set(
        b2.astype(jnp.float32).reshape(1, C))

    kernel = functools.partial(_textmlp_kernel, inv_s=1.0 / S)

    out = pl.pallas_call(
        kernel,
        out_shape=jax.ShapeDtypeStruct((B_pad, CP), jnp.float32),
        grid=(B_pad // TB,),
        in_specs=[
            pl.BlockSpec((TB, V), lambda i: (i, 0)),   # counts: batch-tiled
            pl.BlockSpec((V, D), lambda i: (0, 0)),    # emb table: resident
            pl.BlockSpec((D, H), lambda i: (0, 0)),    # W1: resident
            pl.BlockSpec((1, H), lambda i: (0, 0)),    # b1
            pl.BlockSpec((H, CP), lambda i: (0, 0)),   # W2 (padded): resident
            pl.BlockSpec((1, CP), lambda i: (0, 0)),   # b2 (padded)
        ],
        out_specs=pl.BlockSpec((TB, CP), lambda i: (i, 0)),
        compiler_params=pltpu.CompilerParams(
            dimension_semantics=("parallel",)),
    )(counts, emb_bf16, w1_bf16, b1_2d, w2_pad, b2_pad)

    return out[:B, :C]


if __name__ == "__main__":
    key = jax.random.PRNGKey(0)
    k_emb, k_w1, k_b1, k_w2, k_b2, k_ids = jax.random.split(key, 6)

    # Small, module-consistent shapes (non-pretrained path).
    B, S = 2, 8            # batch, sequence length
    VOCAB = 128            # vocab_size
    D = 768                # embedding dim
    H = 256                # fc1 hidden dim
    C = 2                  # num_classes

    emb_table = jax.random.normal(k_emb, (VOCAB, D), dtype=jnp.float32) * 0.02
    w1 = jax.random.normal(k_w1, (D, H), dtype=jnp.float32) * 0.02
    b1 = jax.random.normal(k_b1, (H,), dtype=jnp.float32) * 0.02
    w2 = jax.random.normal(k_w2, (H, C), dtype=jnp.float32) * 0.02
    b2 = jax.random.normal(k_b2, (C,), dtype=jnp.float32) * 0.02
    input_ids = jax.random.randint(k_ids, (B, S), 0, VOCAB, dtype=jnp.int32)

    out = textmlp_forward(input_ids, emb_table, w1, b1, w2, b2)
    out = jax.block_until_ready(out)

    # Plain-JAX f32 reference (bf16 MXU path -> loose tolerance).
    emb = jnp.take(emb_table, input_ids, axis=0)
    pooled = jnp.mean(emb, axis=1)
    h = jnp.maximum(pooled @ w1 + b1, 0.0)
    ref = jax.nn.softmax(h @ w2 + b2, axis=-1)

    assert out.shape == (B, C)
    assert bool(jnp.all(jnp.isfinite(out)))
    assert jnp.allclose(jnp.sum(out, axis=1), 1.0, atol=1e-2)
    assert jnp.allclose(out, ref, atol=2e-2)

    print("KERNEL_OK")
</pallas_src>

<mosaic_0001>
module attributes {stable_mosaic.version = 11 : i64} {
  func.func @_textmlp_kernel(%arg0: i32, %arg1: memref<8x128xbf16, #tpu.memory_space<vmem>>, %arg2: memref<128x768xbf16, #tpu.memory_space<vmem>>, %arg3: memref<768x256xbf16, #tpu.memory_space<vmem>>, %arg4: memref<1x256xf32, #tpu.memory_space<vmem>>, %arg5: memref<256x128xbf16, #tpu.memory_space<vmem>>, %arg6: memref<1x128xf32, #tpu.memory_space<vmem>>, %arg7: memref<8x128xf32, #tpu.memory_space<vmem>>) attributes {dimension_semantics = [#tpu.dimension_semantics<parallel>], iteration_bounds = array<i64: 1>, scalar_prefetch = 0 : i64, scratch_operands = 0 : i64, tpu.core_type = #tpu.core_type<tc>, window_params = [{transform_indices = @transform_0, window_bounds = array<i64: 8, 128>}, {pipeline_mode = #tpu.pipeline_mode<synchronous>, transform_indices = @transform_1, window_bounds = array<i64: 128, 768>}, {pipeline_mode = #tpu.pipeline_mode<synchronous>, transform_indices = @transform_2, window_bounds = array<i64: 768, 256>}, {pipeline_mode = #tpu.pipeline_mode<synchronous>, transform_indices = @transform_3, window_bounds = array<i64: 1, 256>}, {pipeline_mode = #tpu.pipeline_mode<synchronous>, transform_indices = @transform_4, window_bounds = array<i64: 256, 128>}, {pipeline_mode = #tpu.pipeline_mode<synchronous>, transform_indices = @transform_5, window_bounds = array<i64: 1, 128>}, {transform_indices = @transform_6, window_bounds = array<i64: 8, 128>}]} {
    %c0 = arith.constant 0 : index
    %c0_0 = arith.constant 0 : index
    %0 = vector.load %arg1[%c0, %c0_0] : memref<8x128xbf16, #tpu.memory_space<vmem>>, vector<8x128xbf16>
    %c0_1 = arith.constant 0 : index
    %c0_2 = arith.constant 0 : index
    %1 = vector.load %arg2[%c0_1, %c0_2] : memref<128x768xbf16, #tpu.memory_space<vmem>>, vector<128x768xbf16>
    %cst = arith.constant dense<0.000000e+00> : vector<8x768xf32>
    %2 = tpu.matmul %0, %1, %cst {dimension_numbers = #tpu.dot_dimension_numbers<[1], [0], [0], [1], [0, 0, 1, 1], [], []>} : vector<8x128xbf16>, vector<128x768xbf16>, vector<8x768xf32> -> vector<8x768xf32>
    %cst_3 = arith.constant 1.250000e-01 : f32
    %3 = vector.broadcast %cst_3 : f32 to vector<8x768xf32>
    %4 = arith.mulf %2, %3 : vector<8x768xf32>
    %5 = arith.truncf %4 : vector<8x768xf32> to vector<8x768xbf16>
    %c0_4 = arith.constant 0 : index
    %c0_5 = arith.constant 0 : index
    %6 = vector.load %arg3[%c0_4, %c0_5] : memref<768x256xbf16, #tpu.memory_space<vmem>>, vector<768x256xbf16>
    %cst_6 = arith.constant dense<0.000000e+00> : vector<8x256xf32>
    %7 = tpu.matmul %5, %6, %cst_6 {dimension_numbers = #tpu.dot_dimension_numbers<[1], [0], [0], [1], [0, 0, 1, 1], [], []>} : vector<8x768xbf16>, vector<768x256xbf16>, vector<8x256xf32> -> vector<8x256xf32>
    %c0_7 = arith.constant 0 : index
    %c0_8 = arith.constant 0 : index
    %8 = vector.load %arg4[%c0_7, %c0_8] : memref<1x256xf32, #tpu.memory_space<vmem>>, vector<1x256xf32>
    %9 = vector.broadcast %8 : vector<1x256xf32> to vector<8x256xf32>
    %10 = arith.addf %7, %9 : vector<8x256xf32>
    %cst_9 = arith.constant 0.000000e+00 : f32
    %11 = vector.broadcast %cst_9 : f32 to vector<8x256xf32>
    %12 = arith.maximumf %10, %11 : vector<8x256xf32>
    %13 = arith.truncf %12 : vector<8x256xf32> to vector<8x256xbf16>
    %c0_10 = arith.constant 0 : index
    %c0_11 = arith.constant 0 : index
    %14 = vector.load %arg5[%c0_10, %c0_11] : memref<256x128xbf16, #tpu.memory_space<vmem>>, vector<256x128xbf16>
    %cst_12 = arith.constant dense<0.000000e+00> : vector<8x128xf32>
    %15 = tpu.matmul %13, %14, %cst_12 {dimension_numbers = #tpu.dot_dimension_numbers<[1], [0], [0], [1], [0, 0, 1, 1], [], []>} : vector<8x256xbf16>, vector<256x128xbf16>, vector<8x128xf32> -> vector<8x128xf32>
    %c0_13 = arith.constant 0 : index
    %c0_14 = arith.constant 0 : index
    %16 = vector.load %arg6[%c0_13, %c0_14] : memref<1x128xf32, #tpu.memory_space<vmem>>, vector<1x128xf32>
    %17 = vector.broadcast %16 : vector<1x128xf32> to vector<8x128xf32>
    %18 = arith.addf %15, %17 : vector<8x128xf32>
    %cst_15 = arith.constant dense<0xFF800000> : vector<8xf32>
    %19 = vector.multi_reduction <maximumf>, %18, %cst_15 [1] : vector<8x128xf32> to vector<8xf32>
    %20 = vector.shape_cast %19 : vector<8xf32> to vector<8x1xf32>
    %21 = vector.broadcast %20 : vector<8x1xf32> to vector<8x128xf32>
    %22 = arith.subf %18, %21 : vector<8x128xf32>
    %23 = math.exp %22 : vector<8x128xf32>
    %cst_16 = arith.constant dense<0.000000e+00> : vector<8xf32>
    %24 = vector.multi_reduction <add>, %23, %cst_16 [1] : vector<8x128xf32> to vector<8xf32>
    %25 = vector.shape_cast %24 : vector<8xf32> to vector<8x1xf32>
    %26 = tpu.reciprocal %25 {approx = true} : vector<8x1xf32> -> vector<8x1xf32>
    %27 = vector.broadcast %26 : vector<8x1xf32> to vector<8x128xf32>
    %28 = arith.mulf %23, %27 : vector<8x128xf32>
    %c0_17 = arith.constant 0 : index
    %c0_18 = arith.constant 0 : index
    %29 = vector.load %arg7[%c0_17, %c0_18] : memref<8x128xf32, #tpu.memory_space<vmem>>, vector<8x128xf32>
    tpu.vector_store %arg7[%c0_17, %c0_18], %28 {strides = array<i32>} : memref<8x128xf32, #tpu.memory_space<vmem>>, vector<8x128xf32>,
    return
  }
  func.func @transform_0(%arg0: i32) -> (i32, i32) {
    %c0_i32 = arith.constant 0 : i32
    %c0_i32_0 = arith.constant 0 : i32
    return %arg0, %c0_i32 : i32, i32
  }
  func.func @transform_1(%arg0: i32) -> (i32, i32) {
    %c0_i32 = arith.constant 0 : i32
    %c0_i32_0 = arith.constant 0 : i32
    %c0_i32_1 = arith.constant 0 : i32
    return %c0_i32, %c0_i32_0 : i32, i32
  }
  func.func @transform_2(%arg0: i32) -> (i32, i32) {
    %c0_i32 = arith.constant 0 : i32
    %c0_i32_0 = arith.constant 0 : i32
    %c0_i32_1 = arith.constant 0 : i32
    return %c0_i32, %c0_i32_0 : i32, i32
  }
  func.func @transform_3(%arg0: i32) -> (i32, i32) {
    %c0_i32 = arith.constant 0 : i32
    %c0_i32_0 = arith.constant 0 : i32
    %c0_i32_1 = arith.constant 0 : i32
    return %c0_i32, %c0_i32_0 : i32, i32
  }
  func.func @transform_4(%arg0: i32) -> (i32, i32) {
    %c0_i32 = arith.constant 0 : i32
    %c0_i32_0 = arith.constant 0 : i32
    %c0_i32_1 = arith.constant 0 : i32
    return %c0_i32, %c0_i32_0 : i32, i32
  }
  func.func @transform_5(%arg0: i32) -> (i32, i32) {
    %c0_i32 = arith.constant 0 : i32
    %c0_i32_0 = arith.constant 0 : i32
    %c0_i32_1 = arith.constant 0 : i32
    return %c0_i32, %c0_i32_0 : i32, i32
  }
  func.func @transform_6(%arg0: i32) -> (i32, i32) {
    %c0_i32 = arith.constant 0 : i32
    %c0_i32_0 = arith.constant 0 : i32
    return %arg0, %c0_i32 : i32, i32
  }
}

</mosaic_0001>

<llo_original>
// kernel: tpu_custom_call.1
$region0: #{tpu_custom_call.1}
  #allocation0 [shape = 'u32[]', space=smem, size = 0x4, offset = 0x4, fixed_abs, tag = 'smem constant byte address 0x4 - core index']
  #allocation1 [shape = 'u32[144,128]{1,0:T(1,128)}', space=vmem, size = 0x12000, scoped, tag = 'internal scratch']
  %s0 = inlined_call_operand.hbm [shape: bf16[8,128], index: 0, kind: input, shape index: {}]
  %s1 = inlined_call_operand.hbm [shape: bf16[128,768], index: 1, kind: input, shape index: {}]
  %s2 = inlined_call_operand.hbm [shape: bf16[768,256], index: 2, kind: input, shape index: {}]
  %s3 = inlined_call_operand.vmem [shape: f32[1,256], index: 3, kind: input, shape index: {}]
  %s4 = inlined_call_operand.hbm [shape: bf16[256,128], index: 4, kind: input, shape index: {}]
  %s5 = inlined_call_operand.vmem [shape: f32[1,128], index: 5, kind: input, shape index: {}]
  %s6 = inlined_call_operand.hbm [shape: f32[8,128], index: 6, kind: output, shape index: {}]
  %s7 = sld [smem:[#allocation0]]
  $region50: #{tpu_custom_call.1} parent=0
    _
  %s9 = ssub.s32 1, %s7
  %s10 = scalar_select 0, %s9, %s7
  $region1: #{tpu_custom_call.1} parent=0
    #allocation2 [shape = 'u8[2048]{0}', space=vmem, size = 0x800, scoped, tag = 'input window, operand 0, single buffered']
    #allocation3 [shape = 's32[1]{0}', space=sflag, size = 0x4, scoped, tag = 'scoped memory for tpu_custom_call.1']
    #allocation4 [shape = 's32[1]{0}', space=sflag, size = 0x4, scoped, tag = 'scoped memory for tpu_custom_call.1']
    #allocation5 [shape = 'u8[196608]{0}', space=vmem, size = 0x30000, scoped, tag = 'input window, operand 1, single buffered']
    #allocation6 [shape = 's32[1]{0}', space=sflag, size = 0x4, scoped, tag = 'scoped memory for tpu_custom_call.1']
    #allocation7 [shape = 'u8[393216]{0}', space=vmem, size = 0x60000, scoped, tag = 'input window, operand 2, single buffered']
    #allocation8 [shape = 'u8[65536]{0}', space=vmem, size = 0x10000, scoped, tag = 'input window, operand 4, single buffered']
    #allocation9 [shape = 's32[1]{0}', space=sflag, size = 0x4, scoped, tag = 'scoped memory for tpu_custom_call.1']
    #allocation10 [shape = 'u8[4096]{0}', space=vmem, size = 0x1000, scoped, tag = 'output window, operand 0, single buffered']
    %11 = vsyncpa [#allocation3], 0
    %12 = vsyncpa [#allocation6], 0
    %13 = vsyncpa [#allocation9], 0
    %14 = vsyncpa [#allocation4], 0
    // Predicated region
    $region2: #{tpu_custom_call.1} parent=1 // pred_check
      _
    $region3: #{tpu_custom_call.1} parent=1 // pred_check_branch
      %16 = sbr.rel (0) target = $region5
    $region4: #{tpu_custom_call.1} parent=1 // pred_region
      %s18 = ssub.s32 64, 64
      %19 = vsyncadd [#allocation3], %s18
      %s21 = sshll.u32 [#allocation2], 4
      %s22 = int_to_ptr.vmem [resolvable:$true] %s21
      %24 = dma.hbm_to_vmem [thread:$0]  %s0, 64, %s22, [#allocation3]
    $region5: #{tpu_custom_call.1} parent=1 // pred_fallthru
      _
    // Predicated region
    $region6: #{tpu_custom_call.1} parent=1 // pred_check
      _
    $region7: #{tpu_custom_call.1} parent=1 // pred_check_branch
      %26 = sbr.rel (0) target = $region9
    $region8: #{tpu_custom_call.1} parent=1 // pred_region
      %s28 = ssub.s32 6144, 6144
      %29 = vsyncadd [#allocation6], %s28
      %s30 = sshll.u32 [#allocation5], 4
      %s31 = int_to_ptr.vmem [resolvable:$true] %s30
      %36 = dma.hbm_to_vmem [thread:$0]  %s1, 6144, %s31, [#allocation6], 384, 384, 24
    $region9: #{tpu_custom_call.1} parent=1 // pred_fallthru
      _
    // Predicated region
    $region10: #{tpu_custom_call.1} parent=1 // pred_check
      _
    $region11: #{tpu_custom_call.1} parent=1 // pred_check_branch
      %38 = sbr.rel (0) target = $region13
    $region12: #{tpu_custom_call.1} parent=1 // pred_region
      %s40 = ssub.s32 12288, 12288
      %41 = vsyncadd [#allocation6], %s40
      %s42 = sshll.u32 [#allocation7], 4
      %s43 = int_to_ptr.vmem [resolvable:$true] %s42
      %48 = dma.hbm_to_vmem [thread:$0]  %s2, 12288, %s43, [#allocation6], 128, 128, 8
    $region13: #{tpu_custom_call.1} parent=1 // pred_fallthru
      _
    // Predicated region
    $region14: #{tpu_custom_call.1} parent=1 // pred_check
      _
    $region15: #{tpu_custom_call.1} parent=1 // pred_check_branch
      %50 = sbr.rel (0) target = $region17
    $region16: #{tpu_custom_call.1} parent=1 // pred_region
      _
    $region17: #{tpu_custom_call.1} parent=1 // pred_fallthru
      _
    // Predicated region
    $region18: #{tpu_custom_call.1} parent=1 // pred_check
      _
    $region19: #{tpu_custom_call.1} parent=1 // pred_check_branch
      %52 = sbr.rel (0) target = $region21
    $region20: #{tpu_custom_call.1} parent=1 // pred_region
      %s54 = ssub.s32 2048, 2048
      %55 = vsyncadd [#allocation9], %s54
      %s56 = sshll.u32 [#allocation8], 4
      %s57 = int_to_ptr.vmem [resolvable:$true] %s56
      %62 = dma.hbm_to_vmem [thread:$0]  %s4, 2048, %s57, [#allocation9], 64, 64, 4
    $region21: #{tpu_custom_call.1} parent=1 // pred_fallthru
      _
    // Predicated region
    $region22: #{tpu_custom_call.1} parent=1 // pred_check
      _
    $region23: #{tpu_custom_call.1} parent=1 // pred_check_branch
      %64 = sbr.rel (0) target = $region25
    $region24: #{tpu_custom_call.1} parent=1 // pred_region
      _
    $region25: #{tpu_custom_call.1} parent=1 // pred_fallthru
      _
    // Predicated region
    $region26: #{tpu_custom_call.1} parent=1 // pred_check
      _
    $region27: #{tpu_custom_call.1} parent=1 // pred_check_branch
      %66 = sbr.rel (0) target = $region29
    $region28: #{tpu_custom_call.1} parent=1 // pred_region
      %67 = dma.done [#allocation3], 64
    $region29: #{tpu_custom_call.1} parent=1 // pred_fallthru
      _
    // Predicated region
    $region30: #{tpu_custom_call.1} parent=1 // pred_check
      _
    $region31: #{tpu_custom_call.1} parent=1 // pred_check_branch
      %69 = sbr.rel (0) target = $region33
    $region32: #{tpu_custom_call.1} parent=1 // pred_region
      %70 = dma.done [#allocation6], 6144
    $region33: #{tpu_custom_call.1} parent=1 // pred_fallthru
      _
    // Predicated region
    $region34: #{tpu_custom_call.1} parent=1 // pred_check
      _
    $region35: #{tpu_custom_call.1} parent=1 // pred_check_branch
      %72 = sbr.rel (0) target = $region37
    $region36: #{tpu_custom_call.1} parent=1 // pred_region
      %73 = dma.done [#allocation6], 12288
    $region37: #{tpu_custom_call.1} parent=1 // pred_fallthru
      _
    // Predicated region
    $region38: #{tpu_custom_call.1} parent=1 // pred_check
      _
    $region39: #{tpu_custom_call.1} parent=1 // pred_check_branch
      %75 = sbr.rel (0) target = $region41
    $region40: #{tpu_custom_call.1} parent=1 // pred_region
      %76 = dma.done [#allocation9], 2048
    $region41: #{tpu_custom_call.1} parent=1 // pred_fallthru
      _
    %v78 = vld [vmem:[#allocation2] sm:$0xf]
    %v79 = vld [vmem:[#allocation5] sm:$0xff]
    %v80 = vld [vmem:[#allocation5 + $0x8] sm:$0xff]
    %v81 = vld [vmem:[#allocation5 + $0x10] sm:$0xff]
    %v82 = vld [vmem:[#allocation5 + $0x18] sm:$0xff]
    %v83 = vld [vmem:[#allocation5 + $0x20] sm:$0xff]
    %v84 = vld [vmem:[#allocation5 + $0x28] sm:$0xff]
    %v85 = vld [vmem:[#allocation5 + $0x30] sm:$0xff]
    %v86 = vld [vmem:[#allocation5 + $0x38] sm:$0xff]
    %v87 = vld [vmem:[#allocation5 + $0x40] sm:$0xff]
    %v88 = vld [vmem:[#allocation5 + $0x48] sm:$0xff]
    %v89 = vld [vmem:[#allocation5 + $0x50] sm:$0xff]
    %v90 = vld [vmem:[#allocation5 + $0x58] sm:$0xff]
    %v91 = vld [vmem:[#allocation5 + $0x60] sm:$0xff]
    %v92 = vld [vmem:[#allocation5 + $0x68] sm:$0xff]
    %v93 = vld [vmem:[#allocation5 + $0x70] sm:$0xff]
    %v94 = vld [vmem:[#allocation5 + $0x78] sm:$0xff]
    %v95 = vld [vmem:[#allocation5 + $0x80] sm:$0xff]
    %v96 = vld [vmem:[#allocation5 + $0x88] sm:$0xff]
    %v97 = vld [vmem:[#allocation5 + $0x90] sm:$0xff]
    %v98 = vld [vmem:[#allocation5 + $0x98] sm:$0xff]
    %v99 = vld [vmem:[#allocation5 + $0xa0] sm:$0xff]
    %v100 = vld [vmem:[#allocation5 + $0xa8] sm:$0xff]
    %v101 = vld [vmem:[#allocation5 + $0xb0] sm:$0xff]
    %v102 = vld [vmem:[#allocation5 + $0xb8] sm:$0xff]
    %v103 = vld [vmem:[#allocation5 + $0xc0] sm:$0xff]
    %v104 = vld [vmem:[#allocation5 + $0xc8] sm:$0xff]
    %v105 = vld [vmem:[#allocation5 + $0xd0] sm:$0xff]
    %v106 = vld [vmem:[#allocation5 + $0xd8] sm:$0xff]
    %v107 = vld [vmem:[#allocation5 + $0xe0] sm:$0xff]
    %v108 = vld [vmem:[#allocation5 + $0xe8] sm:$0xff]
    %v109 = vld [vmem:[#allocation5 + $0xf0] sm:$0xff]
    %v110 = vld [vmem:[#allocation5 + $0xf8] sm:$0xff]
    %v111 = vld [vmem:[#allocation5 + $0x100] sm:$0xff]
    %v112 = vld [vmem:[#allocation5 + $0x108] sm:$0xff]
    %v113 = vld [vmem:[#allocation5 + $0x110] sm:$0xff]
    %v114 = vld [vmem:[#allocation5 + $0x118] sm:$0xff]
    %v115 = vld [vmem:[#allocation5 + $0x120] sm:$0xff]
    %v116 = vld [vmem:[#allocation5 + $0x128] sm:$0xff]
    %v117 = vld [vmem:[#allocation5 + $0x130] sm:$0xff]
    %v118 = vld [vmem:[#allocation5 + $0x138] sm:$0xff]
    %v119 = vld [vmem:[#allocation5 + $0x140] sm:$0xff]
    %v120 = vld [vmem:[#allocation5 + $0x148] sm:$0xff]
    %v121 = vld [vmem:[#allocation5 + $0x150] sm:$0xff]
    %v122 = vld [vmem:[#allocation5 + $0x158] sm:$0xff]
    %v123 = vld [vmem:[#allocation5 + $0x160] sm:$0xff]
    %v124 = vld [vmem:[#allocation5 + $0x168] sm:$0xff]
    %v125 = vld [vmem:[#allocation5 + $0x170] sm:$0xff]
    %v126 = vld [vmem:[#allocation5 + $0x178] sm:$0xff]
    %v175 = vunpack.c.l.b16 %v79
    %v176 = vunpack.c.h.b16 %v79
    %v177 = vunpack.c.l.b16 %v80
    %v178 = vunpack.c.h.b16 %v80
    %v179 = vunpack.c.l.b16 %v81
    %v180 = vunpack.c.h.b16 %v81
    %v181 = vunpack.c.l.b16 %v82
    %v182 = vunpack.c.h.b16 %v82
    %v183 = vunpack.c.l.b16 %v83
    %v184 = vunpack.c.h.b16 %v83
    %v185 = vunpack.c.l.b16 %v84
    %v186 = vunpack.c.h.b16 %v84
    %v187 = vunpack.c.l.b16 %v85
    %v188 = vunpack.c.h.b16 %v85
    %v189 = vunpack.c.l.b16 %v86
    %v190 = vunpack.c.h.b16 %v86
    %v191 = vunpack.c.l.b16 %v87
    %v192 = vunpack.c.h.b16 %v87
    %v193 = vunpack.c.l.b16 %v88
    %v194 = vunpack.c.h.b16 %v88
    %v195 = vunpack.c.l.b16 %v89
    %v196 = vunpack.c.h.b16 %v89
    %v197 = vunpack.c.l.b16 %v90
    %v198 = vunpack.c.h.b16 %v90
    %v199 = vunpack.c.l.b16 %v91
    %v200 = vunpack.c.h.b16 %v91
    %v201 = vunpack.c.l.b16 %v92
    %v202 = vunpack.c.h.b16 %v92
    %v203 = vunpack.c.l.b16 %v93
    %v204 = vunpack.c.h.b16 %v93
    %v205 = vunpack.c.l.b16 %v94
    %v206 = vunpack.c.h.b16 %v94
    %v207 = vunpack.c.l.b16 %v95
    %v208 = vunpack.c.h.b16 %v95
    %v209 = vunpack.c.l.b16 %v96
    %v210 = vunpack.c.h.b16 %v96
    %v211 = vunpack.c.l.b16 %v97
    %v212 = vunpack.c.h.b16 %v97
    %v213 = vunpack.c.l.b16 %v98
    %v214 = vunpack.c.h.b16 %v98
    %v215 = vunpack.c.l.b16 %v99
    %v216 = vunpack.c.h.b16 %v99
    %v217 = vunpack.c.l.b16 %v100
    %v218 = vunpack.c.h.b16 %v100
    %v219 = vunpack.c.l.b16 %v101
    %v220 = vunpack.c.h.b16 %v101
    %v221 = vunpack.c.l.b16 %v102
    %v222 = vunpack.c.h.b16 %v102
    %v223 = vunpack.c.l.b16 %v103
    %v224 = vunpack.c.h.b16 %v103
    %v225 = vunpack.c.l.b16 %v104
    %v226 = vunpack.c.h.b16 %v104
    %v227 = vunpack.c.l.b16 %v105
    %v228 = vunpack.c.h.b16 %v105
    %v229 = vunpack.c.l.b16 %v106
    %v230 = vunpack.c.h.b16 %v106
    %v231 = vunpack.c.l.b16 %v107
    %v232 = vunpack.c.h.b16 %v107
    %v233 = vunpack.c.l.b16 %v108
    %v234 = vunpack.c.h.b16 %v108
    %v235 = vunpack.c.l.b16 %v109
    %v236 = vunpack.c.h.b16 %v109
    %v237 = vunpack.c.l.b16 %v110
    %v238 = vunpack.c.h.b16 %v110
    %v239 = vunpack.c.l.b16 %v111
    %v240 = vunpack.c.h.b16 %v111
    %v241 = vunpack.c.l.b16 %v112
    %v242 = vunpack.c.h.b16 %v112
    %v243 = vunpack.c.l.b16 %v113
    %v244 = vunpack.c.h.b16 %v113
    %v245 = vunpack.c.l.b16 %v114
    %v246 = vunpack.c.h.b16 %v114
    %v247 = vunpack.c.l.b16 %v115
    %v248 = vunpack.c.h.b16 %v115
    %v249 = vunpack.c.l.b16 %v116
    %v250 = vunpack.c.h.b16 %v116
    %v251 = vunpack.c.l.b16 %v117
    %v252 = vunpack.c.h.b16 %v117
    %v253 = vunpack.c.l.b16 %v118
    %v254 = vunpack.c.h.b16 %v118
    %v255 = vunpack.c.l.b16 %v119
    %v256 = vunpack.c.h.b16 %v119
    %v257 = vunpack.c.l.b16 %v120
    %v258 = vunpack.c.h.b16 %v120
    %v259 = vunpack.c.l.b16 %v121
    %v260 = vunpack.c.h.b16 %v121
    %v261 = vunpack.c.l.b16 %v122
    %v262 = vunpack.c.h.b16 %v122
    %v263 = vunpack.c.l.b16 %v123
    %v264 = vunpack.c.h.b16 %v123
    %v265 = vunpack.c.l.b16 %v124
    %v266 = vunpack.c.h.b16 %v124
    %v267 = vunpack.c.l.b16 %v125
    %v268 = vunpack.c.h.b16 %v125
    %v269 = vunpack.c.l.b16 %v126
    %v270 = vunpack.c.h.b16 %v126
    %v271 = vpack.c.b16 %v181, %v175
    %v272 = vpack.c.b16 %v182, %v176
    %v273 = vpack.c.b16 %v183, %v177
    %v274 = vpack.c.b16 %v184, %v178
    %v275 = vpack.c.b16 %v185, %v179
    %v276 = vpack.c.b16 %v186, %v180
    %v277 = vpack.c.b16 %v193, %v187
    %v278 = vpack.c.b16 %v194, %v188
    %v279 = vpack.c.b16 %v195, %v189
    %v280 = vpack.c.b16 %v196, %v190
    %v281 = vpack.c.b16 %v197, %v191
    %v282 = vpack.c.b16 %v198, %v192
    %v283 = vpack.c.b16 %v205, %v199
    %v284 = vpack.c.b16 %v206, %v200
    %v285 = vpack.c.b16 %v207, %v201
    %v286 = vpack.c.b16 %v208, %v202
    %v287 = vpack.c.b16 %v209, %v203
    %v288 = vpack.c.b16 %v210, %v204
    %v289 = vpack.c.b16 %v217, %v211
    %v290 = vpack.c.b16 %v218, %v212
    %v291 = vpack.c.b16 %v219, %v213
    %v292 = vpack.c.b16 %v220, %v214
    %v293 = vpack.c.b16 %v221, %v215
    %v294 = vpack.c.b16 %v222, %v216
    %v295 = vpack.c.b16 %v229, %v223
    %v296 = vpack.c.b16 %v230, %v224
    %v297 = vpack.c.b16 %v231, %v225
    %v298 = vpack.c.b16 %v232, %v226
    %v299 = vpack.c.b16 %v233, %v227
    %v300 = vpack.c.b16 %v234, %v228
    %v301 = vpack.c.b16 %v241, %v235
    %v302 = vpack.c.b16 %v242, %v236
    %v303 = vpack.c.b16 %v243, %v237
    %v304 = vpack.c.b16 %v244, %v238
    %v305 = vpack.c.b16 %v245, %v239
    %v306 = vpack.c.b16 %v246, %v240
    %v307 = vpack.c.b16 %v253, %v247
    %v308 = vpack.c.b16 %v254, %v248
    %v309 = vpack.c.b16 %v255, %v249
    %v310 = vpack.c.b16 %v256, %v250
    %v311 = vpack.c.b16 %v257, %v251
    %v312 = vpack.c.b16 %v258, %v252
    %v313 = vpack.c.b16 %v265, %v259
    %v314 = vpack.c.b16 %v266, %v260
    %v315 = vpack.c.b16 %v267, %v261
    %v316 = vpack.c.b16 %v268, %v262
    %v317 = vpack.c.b16 %v269, %v263
    %v318 = vpack.c.b16 %v270, %v264
    %367 = vmatprep.subr.bf16.mxu0 %v314
    %368 = vmatpush1.bf16.msra.mxu0 %v313
    %369 = vmatprep.subr.bf16.mxu0 %v308
    %370 = vmatpush1.bf16.msra.mxu0 %v307
    %371 = vmatprep.subr.bf16.mxu0 %v302
    %372 = vmatpush1.bf16.msra.mxu0 %v301
    %373 = vmatprep.subr.bf16.mxu0 %v296
    %374 = vmatpush1.bf16.msra.mxu0 %v295
    %375 = vmatprep.subr.bf16.mxu0 %v290
    %376 = vmatpush1.bf16.msra.mxu0 %v289
    %377 = vmatprep.subr.bf16.mxu0 %v284
    %378 = vmatpush1.bf16.msra.mxu0 %v283
    %379 = vmatprep.subr.bf16.mxu0 %v278
    %380 = vmatpush1.bf16.msra.mxu0 %v277
    %381 = vmatprep.subr.bf16.mxu0 %v272
    %382 = vmatpush1.bf16.msra.mxu0 %v271
    %383 = vmatprep.subr.bf16.mxu0 0
    %384 = vmatpush2.bf16.msra.mxu0 0
    %385 = vmatprep.subr.bf16.mxu0 0
    %386 = vmatpush2.bf16.msra.mxu0 0
    %387 = vmatprep.subr.bf16.mxu0 0
    %388 = vmatpush2.bf16.msra.mxu0 0
    %389 = vmatprep.subr.bf16.mxu0 0
    %390 = vmatpush2.bf16.msra.mxu0 0
    %391 = vmatprep.subr.bf16.mxu0 0
    %392 = vmatpush2.bf16.msra.mxu0 0
    %393 = vmatprep.subr.bf16.mxu0 0
    %394 = vmatpush2.bf16.msra.mxu0 0
    %395 = vmatprep.subr.bf16.mxu0 0
    %396 = vmatpush2.bf16.msra.mxu0 0
    %397 = vmatprep.subr.bf16.mxu0 0
    %398 = vmatpush2.bf16.msra.mxu0 0
    %399 = vmatprep.mubr.bf16.mxu0 0
    %400 = vmatmul.mubr.bf16.gmra.mxu0 %v78
    %v401 = vpop.f32.mrf.mxu0
    %v402 = vadd.f32 0.0, %v401
    %v403 = vpop.f32.mrf.mxu0
    %v404 = vadd.f32 0.0, %v403
    %v405 = vpop.f32.mrf.mxu0
    %v406 = vpop.f32.mrf.mxu0
    %407 = vdwg.mxu0
    %408 = vmatprep.subr.bf16.mxu0 %v316
    %409 = vmatpush1.bf16.msra.mxu0 %v315
    %410 = vmatprep.subr.bf16.mxu0 %v310
    %411 = vmatpush1.bf16.msra.mxu0 %v309
    %412 = vmatprep.subr.bf16.mxu0 %v304
    %413 = vmatpush1.bf16.msra.mxu0 %v303
    %414 = vmatprep.subr.bf16.mxu0 %v298
    %415 = vmatpush1.bf16.msra.mxu0 %v297
    %416 = vmatprep.subr.bf16.mxu0 %v292
    %417 = vmatpush1.bf16.msra.mxu0 %v291
    %418 = vmatprep.subr.bf16.mxu0 %v286
    %419 = vmatpush1.bf16.msra.mxu0 %v285
    %420 = vmatprep.subr.bf16.mxu0 %v280
    %421 = vmatpush1.bf16.msra.mxu0 %v279
    %422 = vmatprep.subr.bf16.mxu0 %v274
    %423 = vmatpush1.bf16.msra.mxu0 %v273
    %424 = vmatprep.subr.bf16.mxu0 0
    %425 = vmatpush2.bf16.msra.mxu0 0
    %426 = vmatprep.subr.bf16.mxu0 0
    %427 = vmatpush2.bf16.msra.mxu0 0
    %428 = vmatprep.subr.bf16.mxu0 0
    %429 = vmatpush2.bf16.msra.mxu0 0
    %430 = vmatprep.subr.bf16.mxu0 0
    %431 = vmatpush2.bf16.msra.mxu0 0
    %432 = vmatprep.subr.bf16.mxu0 0
    %433 = vmatpush2.bf16.msra.mxu0 0
    %434 = vmatprep.subr.bf16.mxu0 0
    %435 = vmatpush2.bf16.msra.mxu0 0
    %436 = vmatprep.subr.bf16.mxu0 0
    %437 = vmatpush2.bf16.msra.mxu0 0
    %438 = vmatprep.subr.bf16.mxu0 0
    %439 = vmatpush2.bf16.msra.mxu0 0
    %440 = vmatprep.mubr.bf16.mxu0 0
    %441 = vmatmul.mubr.bf16.gmra.mxu0 %v78
    %v442 = vpop.f32.mrf.mxu0
    %v443 = vadd.f32 0.0, %v442
    %v444 = vpop.f32.mrf.mxu0
    %v445 = vadd.f32 0.0, %v444
    %v446 = vpop.f32.mrf.mxu0
    %v447 = vpop.f32.mrf.mxu0
    %448 = vdwg.mxu0
    %449 = vmatprep.subr.bf16.mxu0 %v318
    %450 = vmatpush1.bf16.msra.mxu0 %v317
    %451 = vmatprep.subr.bf16.mxu0 %v312
    %452 = vmatpush1.bf16.msra.mxu0 %v311
    %453 = vmatprep.subr.bf16.mxu0 %v306
    %454 = vmatpush1.bf16.msra.mxu0 %v305
    %455 = vmatprep.subr.bf16.mxu0 %v300
    %456 = vmatpush1.bf16.msra.mxu0 %v299
    %457 = vmatprep.subr.bf16.mxu0 %v294
    %458 = vmatpush1.bf16.msra.mxu0 %v293
    %459 = vmatprep.subr.bf16.mxu0 %v288
    %460 = vmatpush1.bf16.msra.mxu0 %v287
    %461 = vmatprep.subr.bf16.mxu0 %v282
    %462 = vmatpush1.bf16.msra.mxu0 %v281
    %463 = vmatprep.subr.bf16.mxu0 %v276
    %464 = vmatpush1.bf16.msra.mxu0 %v275
    %465 = vmatprep.subr.bf16.mxu0 0
    %466 = vmatpush2.bf16.msra.mxu0 0
    %467 = vmatprep.subr.bf16.mxu0 0
    %468 = vmatpush2.bf16.msra.mxu0 0
    %469 = vmatprep.subr.bf16.mxu0 0
    %470 = vmatpush2.bf16.msra.mxu0 0
    %471 = vmatprep.subr.bf16.mxu0 0
    %472 = vmatpush2.bf16.msra.mxu0 0
    %473 = vmatprep.subr.bf16.mxu0 0
    %474 = vmatpush2.bf16.msra.mxu0 0
    %475 = vmatprep.subr.bf16.mxu0 0
    %476 = vmatpush2.bf16.msra.mxu0 0
    %477 = vmatprep.subr.bf16.mxu0 0
    %478 = vmatpush2.bf16.msra.mxu0 0
    %479 = vmatprep.subr.bf16.mxu0 0
    %480 = vmatpush2.bf16.msra.mxu0 0
    %481 = vmatprep.mubr.bf16.mxu0 0
    %482 = vmatmul.mubr.bf16.gmra.mxu0 %v78
    %v483 = vpop.f32.mrf.mxu0
    %v484 = vadd.f32 0.0, %v483
    %v485 = vpop.f32.mrf.mxu0
    %v486 = vadd.f32 0.0, %v485
    %v487 = vpop.f32.mrf.mxu0
    %v488 = vpop.f32.mrf.mxu0
    %489 = vdwg.mxu0
    %v490 = vmul.f32 %v402, 0.125
    %v491 = vmul.f32 %v404, 0.125
    %v492 = vmul.f32 %v443, 0.125
    %v493 = vmul.f32 %v445, 0.125
    %v494 = vmul.f32 %v484, 0.125
    %v495 = vmul.f32 %v486, 0.125
    %v496 = vpack.c.bf16 %v490, %v490
    %v497 = vpack.c.bf16 %v491, %v491
    %v498 = vpack.c.bf16 %v492, %v492
    %v499 = vpack.c.bf16 %v493, %v493
    %v500 = vpack.c.bf16 %v494, %v494
    %v501 = vpack.c.bf16 %v495, %v495
    %v502 = vld [vmem:[#allocation7] sm:$0xff]
    %v503 = vld [vmem:[#allocation7 + $0x8] sm:$0xff]
    %v504 = vld [vmem:[#allocation7 + $0x10] sm:$0xff]
    %v505 = vld [vmem:[#allocation7 + $0x18] sm:$0xff]
    %v506 = vld [vmem:[#allocation7 + $0x20] sm:$0xff]
    %v507 = vld [vmem:[#allocation7 + $0x28] sm:$0xff]
    %v508 = vld [vmem:[#allocation7 + $0x30] sm:$0xff]
    %v509 = vld [vmem:[#allocation7 + $0x38] sm:$0xff]
    %v510 = vld [vmem:[#allocation7 + $0x40] sm:$0xff]
    %v511 = vld [vmem:[#allocation7 + $0x48] sm:$0xff]
    %v512 = vld [vmem:[#allocation7 + $0x50] sm:$0xff]
    %v513 = vld [vmem:[#allocation7 + $0x58] sm:$0xff]
    %v514 = vld [vmem:[#allocation7 + $0x60] sm:$0xff]
    %v515 = vld [vmem:[#allocation7 + $0x68] sm:$0xff]
    %v516 = vld [vmem:[#allocation7 + $0x70] sm:$0xff]
    %v517 = vld [vmem:[#allocation7 + $0x78] sm:$0xff]
    %v518 = vld [vmem:[#allocation7 + $0x80] sm:$0xff]
    %v519 = vld [vmem:[#allocation7 + $0x88] sm:$0xff]
    %v520 = vld [vmem:[#allocation7 + $0x90] sm:$0xff]
    %v521 = vld [vmem:[#allocation7 + $0x98] sm:$0xff]
    %v522 = vld [vmem:[#allocation7 + $0xa0] sm:$0xff]
    %v523 = vld [vmem:[#allocation7 + $0xa8] sm:$0xff]
    %v524 = vld [vmem:[#allocation7 + $0xb0] sm:$0xff]
    %v525 = vld [vmem:[#allocation7 + $0xb8] sm:$0xff]
    %v526 = vld [vmem:[#allocation7 + $0xc0] sm:$0xff]
    %v527 = vld [vmem:[#allocation7 + $0xc8] sm:$0xff]
    %v528 = vld [vmem:[#allocation7 + $0xd0] sm:$0xff]
    %v529 = vld [vmem:[#allocation7 + $0xd8] sm:$0xff]
    %v530 = vld [vmem:[#allocation7 + $0xe0] sm:$0xff]
    %v531 = vld [vmem:[#allocation7 + $0xe8] sm:$0xff]
    %v532 = vld [vmem:[#allocation7 + $0xf0] sm:$0xff]
    %v533 = vld [vmem:[#allocation7 + $0xf8] sm:$0xff]
    %v534 = vld [vmem:[#allocation7 + $0x100] sm:$0xff]
    %v535 = vld [vmem:[#allocation7 + $0x108] sm:$0xff]
    %v536 = vld [vmem:[#allocation7 + $0x110] sm:$0xff]
    %v537 = vld [vmem:[#allocation7 + $0x118] sm:$0xff]
    %v538 = vld [vmem:[#allocation7 + $0x120] sm:$0xff]
    %v539 = vld [vmem:[#allocation7 + $0x128] sm:$0xff]
    %v540 = vld [vmem:[#allocation7 + $0x130] sm:$0xff]
    %v541 = vld [vmem:[#allocation7 + $0x138] sm:$0xff]
    %v542 = vld [vmem:[#allocation7 + $0x140] sm:$0xff]
    %v543 = vld [vmem:[#allocation7 + $0x148] sm:$0xff]
    %v544 = vld [vmem:[#allocation7 + $0x150] sm:$0xff]
    %v545 = vld [vmem:[#allocation7 + $0x158] sm:$0xff]
    %v546 = vld [vmem:[#allocation7 + $0x160] sm:$0xff]
    %v547 = vld [vmem:[#allocation7 + $0x168] sm:$0xff]
    %v548 = vld [vmem:[#allocation7 + $0x170] sm:$0xff]
    %v549 = vld [vmem:[#allocation7 + $0x178] sm:$0xff]
    %v550 = vld [vmem:[#allocation7 + $0x180] sm:$0xff]
    %v551 = vld [vmem:[#allocation7 + $0x188] sm:$0xff]
    %v552 = vld [vmem:[#allocation7 + $0x190] sm:$0xff]
    %v553 = vld [vmem:[#allocation7 + $0x198] sm:$0xff]
    %v554 = vld [vmem:[#allocation7 + $0x1a0] sm:$0xff]
    %v555 = vld [vmem:[#allocation7 + $0x1a8] sm:$0xff]
    %v556 = vld [vmem:[#allocation7 + $0x1b0] sm:$0xff]
    %v557 = vld [vmem:[#allocation7 + $0x1b8] sm:$0xff]
    %v558 = vld [vmem:[#allocation7 + $0x1c0] sm:$0xff]
    %v559 = vld [vmem:[#allocation7 + $0x1c8] sm:$0xff]
    %v560 = vld [vmem:[#allocation7 + $0x1d0] sm:$0xff]
    %v561 = vld [vmem:[#allocation7 + $0x1d8] sm:$0xff]
    %v562 = vld [vmem:[#allocation7 + $0x1e0] sm:$0xff]
    %v563 = vld [vmem:[#allocation7 + $0x1e8] sm:$0xff]
    %v564 = vld [vmem:[#allocation7 + $0x1f0] sm:$0xff]
    %v565 = vld [vmem:[#allocation7 + $0x1f8] sm:$0xff]
    %v566 = vld [vmem:[#allocation7 + $0x200] sm:$0xff]
    %v567 = vld [vmem:[#allocation7 + $0x208] sm:$0xff]
    %v568 = vld [vmem:[#allocation7 + $0x210] sm:$0xff]
    %v569 = vld [vmem:[#allocation7 + $0x218] sm:$0xff]
    %v570 = vld [vmem:[#allocation7 + $0x220] sm:$0xff]
    %v571 = vld [vmem:[#allocation7 + $0x228] sm:$0xff]
    %v572 = vld [vmem:[#allocation7 + $0x230] sm:$0xff]
    %v573 = vld [vmem:[#allocation7 + $0x238] sm:$0xff]
    %v574 = vld [vmem:[#allocation7 + $0x240] sm:$0xff]
    %v575 = vld [vmem:[#allocation7 + $0x248] sm:$0xff]
    %v576 = vld [vmem:[#allocation7 + $0x250] sm:$0xff]
    %v577 = vld [vmem:[#allocation7 + $0x258] sm:$0xff]
    %v578 = vld [vmem:[#allocation7 + $0x260] sm:$0xff]
    %v579 = vld [vmem:[#allocation7 + $0x268] sm:$0xff]
    %v580 = vld [vmem:[#allocation7 + $0x270] sm:$0xff]
    %v581 = vld [vmem:[#allocation7 + $0x278] sm:$0xff]
    %v582 = vld [vmem:[#allocation7 + $0x280] sm:$0xff]
    %v583 = vld [vmem:[#allocation7 + $0x288] sm:$0xff]
    %v584 = vld [vmem:[#allocation7 + $0x290] sm:$0xff]
    %v585 = vld [vmem:[#allocation7 + $0x298] sm:$0xff]
    %v586 = vld [vmem:[#allocation7 + $0x2a0] sm:$0xff]
    %v587 = vld [vmem:[#allocation7 + $0x2a8] sm:$0xff]
    %v588 = vld [vmem:[#allocation7 + $0x2b0] sm:$0xff]
    %v589 = vld [vmem:[#allocation7 + $0x2b8] sm:$0xff]
    %v590 = vld [vmem:[#allocation7 + $0x2c0] sm:$0xff]
    %v591 = vld [vmem:[#allocation7 + $0x2c8] sm:$0xff]
    %v592 = vld [vmem:[#allocation7 + $0x2d0] sm:$0xff]
    %v593 = vld [vmem:[#allocation7 + $0x2d8] sm:$0xff]
    %v594 = vld [vmem:[#allocation7 + $0x2e0] sm:$0xff]
    %v595 = vld [vmem:[#allocation7 + $0x2e8] sm:$0xff]
    %v596 = vld [vmem:[#allocation7 + $0x2f0] sm:$0xff]
    %v597 = vld [vmem:[#allocation7 + $0x2f8] sm:$0xff]
    %v598 = vld [vmem:[%s3] sm:$0x3]
    %v600 = vlaneseq
    %v601 = vshrl.u32 %v600, 7
    %v602 = vsub.s32 0, %v601
    %v603 = vrot.slane %v598, %v602
    %v604 = vlaneseq
    %v605 = vshrl.u32 %v604, 7
    %v606 = vsub.s32 1, %v605
    %v607 = vrot.slane %v598, %v606
    %v706 = vunpack.c.l.b16 %v502
    %v707 = vunpack.c.h.b16 %v502
    %v708 = vunpack.c.l.b16 %v503
    %v709 = vunpack.c.h.b16 %v503
    %v710 = vunpack.c.l.b16 %v504
    %v711 = vunpack.c.h.b16 %v504
    %v712 = vunpack.c.l.b16 %v505
    %v713 = vunpack.c.h.b16 %v505
    %v714 = vunpack.c.l.b16 %v506
    %v715 = vunpack.c.h.b16 %v506
    %v716 = vunpack.c.l.b16 %v507
    %v717 = vunpack.c.h.b16 %v507
    %v718 = vunpack.c.l.b16 %v508
    %v719 = vunpack.c.h.b16 %v508
    %v720 = vunpack.c.l.b16 %v509
    %v721 = vunpack.c.h.b16 %v509
    %v722 = vunpack.c.l.b16 %v510
    %v723 = vunpack.c.h.b16 %v510
    %v724 = vunpack.c.l.b16 %v511
    %v725 = vunpack.c.h.b16 %v511
    %v726 = vunpack.c.l.b16 %v512
    %v727 = vunpack.c.h.b16 %v512
    %v728 = vunpack.c.l.b16 %v513
    %v729 = vunpack.c.h.b16 %v513
    %v730 = vunpack.c.l.b16 %v514
    %v731 = vunpack.c.h.b16 %v514
    %v732 = vunpack.c.l.b16 %v515
    %v733 = vunpack.c.h.b16 %v515
    %v734 = vunpack.c.l.b16 %v516
    %v735 = vunpack.c.h.b16 %v516
    %v736 = vunpack.c.l.b16 %v517
    %v737 = vunpack.c.h.b16 %v517
    %v738 = vunpack.c.l.b16 %v518
    %v739 = vunpack.c.h.b16 %v518
    %v740 = vunpack.c.l.b16 %v519
    %v741 = vunpack.c.h.b16 %v519
    %v742 = vunpack.c.l.b16 %v520
    %v743 = vunpack.c.h.b16 %v520
    %v744 = vunpack.c.l.b16 %v521
    %v745 = vunpack.c.h.b16 %v521
    %v746 = vunpack.c.l.b16 %v522
    %v747 = vunpack.c.h.b16 %v522
    %v748 = vunpack.c.l.b16 %v523
    %v749 = vunpack.c.h.b16 %v523
    %v750 = vunpack.c.l.b16 %v524
    %v751 = vunpack.c.h.b16 %v524
    %v752 = vunpack.c.l.b16 %v525
    %v753 = vunpack.c.h.b16 %v525
    %v754 = vunpack.c.l.b16 %v526
    %v755 = vunpack.c.h.b16 %v526
    %v756 = vunpack.c.l.b16 %v527
    %v757 = vunpack.c.h.b16 %v527
    %v758 = vunpack.c.l.b16 %v528
    %v759 = vunpack.c.h.b16 %v528
    %v760 = vunpack.c.l.b16 %v529
    %v761 = vunpack.c.h.b16 %v529
    %v762 = vunpack.c.l.b16 %v530
    %v763 = vunpack.c.h.b16 %v530
    %v764 = vunpack.c.l.b16 %v531
    %v765 = vunpack.c.h.b16 %v531
    %v766 = vunpack.c.l.b16 %v532
    %v767 = vunpack.c.h.b16 %v532
    %v768 = vunpack.c.l.b16 %v533
    %v769 = vunpack.c.h.b16 %v533
    %v770 = vunpack.c.l.b16 %v534
    %v771 = vunpack.c.h.b16 %v534
    %v772 = vunpack.c.l.b16 %v535
    %v773 = vunpack.c.h.b16 %v535
    %v774 = vunpack.c.l.b16 %v536
    %v775 = vunpack.c.h.b16 %v536
    %v776 = vunpack.c.l.b16 %v537
    %v777 = vunpack.c.h.b16 %v537
    %v778 = vunpack.c.l.b16 %v538
    %v779 = vunpack.c.h.b16 %v538
    %v780 = vunpack.c.l.b16 %v539
    %v781 = vunpack.c.h.b16 %v539
    %v782 = vunpack.c.l.b16 %v540
    %v783 = vunpack.c.h.b16 %v540
    %v784 = vunpack.c.l.b16 %v541
    %v785 = vunpack.c.h.b16 %v541
    %v786 = vunpack.c.l.b16 %v542
    %v787 = vunpack.c.h.b16 %v542
    %v788 = vunpack.c.l.b16 %v543
    %v789 = vunpack.c.h.b16 %v543
    %v790 = vunpack.c.l.b16 %v544
    %v791 = vunpack.c.h.b16 %v544
    %v792 = vunpack.c.l.b16 %v545
    %v793 = vunpack.c.h.b16 %v545
    %v794 = vunpack.c.l.b16 %v546
    %v795 = vunpack.c.h.b16 %v546
    %v796 = vunpack.c.l.b16 %v547
    %v797 = vunpack.c.h.b16 %v547
    %v798 = vunpack.c.l.b16 %v548
    %v799 = vunpack.c.h.b16 %v548
    %v800 = vunpack.c.l.b16 %v549
    %v801 = vunpack.c.h.b16 %v549
    %v802 = vunpack.c.l.b16 %v550
    %v803 = vunpack.c.h.b16 %v550
    %v804 = vunpack.c.l.b16 %v551
    %v805 = vunpack.c.h.b16 %v551
    %v806 = vunpack.c.l.b16 %v552
    %v807 = vunpack.c.h.b16 %v552
    %v808 = vunpack.c.l.b16 %v553
    %v809 = vunpack.c.h.b16 %v553
    %v810 = vunpack.c.l.b16 %v554
    %v811 = vunpack.c.h.b16 %v554
    %v812 = vunpack.c.l.b16 %v555
    %v813 = vunpack.c.h.b16 %v555
    %v814 = vunpack.c.l.b16 %v556
    %v815 = vunpack.c.h.b16 %v556
    %v816 = vunpack.c.l.b16 %v557
    %v817 = vunpack.c.h.b16 %v557
    %v818 = vunpack.c.l.b16 %v558
    %v819 = vunpack.c.h.b16 %v558
    %v820 = vunpack.c.l.b16 %v559
    %v821 = vunpack.c.h.b16 %v559
    %v822 = vunpack.c.l.b16 %v560
    %v823 = vunpack.c.h.b16 %v560
    %v824 = vunpack.c.l.b16 %v561
    %v825 = vunpack.c.h.b16 %v561
    %v826 = vunpack.c.l.b16 %v562
    %v827 = vunpack.c.h.b16 %v562
    %v828 = vunpack.c.l.b16 %v563
    %v829 = vunpack.c.h.b16 %v563
    %v830 = vunpack.c.l.b16 %v564
    %v831 = vunpack.c.h.b16 %v564
    %v832 = vunpack.c.l.b16 %v565
    %v833 = vunpack.c.h.b16 %v565
    %v834 = vunpack.c.l.b16 %v566
    %v835 = vunpack.c.h.b16 %v566
    %v836 = vunpack.c.l.b16 %v567
    %v837 = vunpack.c.h.b16 %v567
    %v838 = vunpack.c.l.b16 %v568
    %v839 = vunpack.c.h.b16 %v568
    %v840 = vunpack.c.l.b16 %v569
    %v841 = vunpack.c.h.b16 %v569
    %v842 = vunpack.c.l.b16 %v570
    %v843 = vunpack.c.h.b16 %v570
    %v844 = vunpack.c.l.b16 %v571
    %v845 = vunpack.c.h.b16 %v571
    %v846 = vunpack.c.l.b16 %v572
    %v847 = vunpack.c.h.b16 %v572
    %v848 = vunpack.c.l.b16 %v573
    %v849 = vunpack.c.h.b16 %v573
    %v850 = vunpack.c.l.b16 %v574
    %v851 = vunpack.c.h.b16 %v574
    %v852 = vunpack.c.l.b16 %v575
    %v853 = vunpack.c.h.b16 %v575
    %v854 = vunpack.c.l.b16 %v576
    %v855 = vunpack.c.h.b16 %v576
    %v856 = vunpack.c.l.b16 %v577
    %v857 = vunpack.c.h.b16 %v577
    %v858 = vunpack.c.l.b16 %v578
    %v859 = vunpack.c.h.b16 %v578
    %v860 = vunpack.c.l.b16 %v579
    %v861 = vunpack.c.h.b16 %v579
    %v862 = vunpack.c.l.b16 %v580
    %v863 = vunpack.c.h.b16 %v580
    %v864 = vunpack.c.l.b16 %v581
    %v865 = vunpack.c.h.b16 %v581
    %v866 = vunpack.c.l.b16 %v582
    %v867 = vunpack.c.h.b16 %v582
    %v868 = vunpack.c.l.b16 %v583
    %v869 = vunpack.c.h.b16 %v583
    %v870 = vunpack.c.l.b16 %v584
    %v871 = vunpack.c.h.b16 %v584
    %v872 = vunpack.c.l.b16 %v585
    %v873 = vunpack.c.h.b16 %v585
    %v874 = vunpack.c.l.b16 %v586
    %v875 = vunpack.c.h.b16 %v586
    %v876 = vunpack.c.l.b16 %v587
    %v877 = vunpack.c.h.b16 %v587
    %v878 = vunpack.c.l.b16 %v588
    %v879 = vunpack.c.h.b16 %v588
    %v880 = vunpack.c.l.b16 %v589
    %v881 = vunpack.c.h.b16 %v589
    %v882 = vunpack.c.l.b16 %v590
    %v883 = vunpack.c.h.b16 %v590
    %v884 = vunpack.c.l.b16 %v591
    %v885 = vunpack.c.h.b16 %v591
    %v886 = vunpack.c.l.b16 %v592
    %v887 = vunpack.c.h.b16 %v592
    %v888 = vunpack.c.l.b16 %v593
    %v889 = vunpack.c.h.b16 %v593
    %v890 = vunpack.c.l.b16 %v594
    %v891 = vunpack.c.h.b16 %v594
    %v892 = vunpack.c.l.b16 %v595
    %v893 = vunpack.c.h.b16 %v595
    %v894 = vunpack.c.l.b16 %v596
    %v895 = vunpack.c.h.b16 %v596
    %v896 = vunpack.c.l.b16 %v597
    %v897 = vunpack.c.h.b16 %v597
    %v898 = vpack.c.b16 %v708, %v706
    %v899 = vpack.c.b16 %v709, %v707
    %v900 = vpack.c.b16 %v712, %v710
    %v901 = vpack.c.b16 %v713, %v711
    %v902 = vpack.c.b16 %v716, %v714
    %v903 = vpack.c.b16 %v717, %v715
    %v904 = vpack.c.b16 %v720, %v718
    %v905 = vpack.c.b16 %v721, %v719
    %v906 = vpack.c.b16 %v724, %v722
    %v907 = vpack.c.b16 %v725, %v723
    %v908 = vpack.c.b16 %v728, %v726
    %v909 = vpack.c.b16 %v729, %v727
    %v910 = vpack.c.b16 %v732, %v730
    %v911 = vpack.c.b16 %v733, %v731
    %v912 = vpack.c.b16 %v736, %v734
    %v913 = vpack.c.b16 %v737, %v735
    %v914 = vpack.c.b16 %v740, %v738
    %v915 = vpack.c.b16 %v741, %v739
    %v916 = vpack.c.b16 %v744, %v742
    %v917 = vpack.c.b16 %v745, %v743
    %v918 = vpack.c.b16 %v748, %v746
    %v919 = vpack.c.b16 %v749, %v747
    %v920 = vpack.c.b16 %v752, %v750
    %v921 = vpack.c.b16 %v753, %v751
    %v922 = vpack.c.b16 %v756, %v754
    %v923 = vpack.c.b16 %v757, %v755
    %v924 = vpack.c.b16 %v760, %v758
    %v925 = vpack.c.b16 %v761, %v759
    %v926 = vpack.c.b16 %v764, %v762
    %v927 = vpack.c.b16 %v765, %v763
    %v928 = vpack.c.b16 %v768, %v766
    %v929 = vpack.c.b16 %v769, %v767
    %v930 = vpack.c.b16 %v772, %v770
    %v931 = vpack.c.b16 %v773, %v771
    %v932 = vpack.c.b16 %v776, %v774
    %v933 = vpack.c.b16 %v777, %v775
    %v934 = vpack.c.b16 %v780, %v778
    %v935 = vpack.c.b16 %v781, %v779
    %v936 = vpack.c.b16 %v784, %v782
    %v937 = vpack.c.b16 %v785, %v783
    %v938 = vpack.c.b16 %v788, %v786
    %v939 = vpack.c.b16 %v789, %v787
    %v940 = vpack.c.b16 %v792, %v790
    %v941 = vpack.c.b16 %v793, %v791
    %v942 = vpack.c.b16 %v796, %v794
    %v943 = vpack.c.b16 %v797, %v795
    %v944 = vpack.c.b16 %v800, %v798
    %v945 = vpack.c.b16 %v801, %v799
    %v946 = vpack.c.b16 %v804, %v802
    %v947 = vpack.c.b16 %v805, %v803
    %v948 = vpack.c.b16 %v808, %v806
    %v949 = vpack.c.b16 %v809, %v807
    %v950 = vpack.c.b16 %v812, %v810
    %v951 = vpack.c.b16 %v813, %v811
    %v952 = vpack.c.b16 %v816, %v814
    %v953 = vpack.c.b16 %v817, %v815
    %v954 = vpack.c.b16 %v820, %v818
    %v955 = vpack.c.b16 %v821, %v819
    %v956 = vpack.c.b16 %v824, %v822
    %v957 = vpack.c.b16 %v825, %v823
    %v958 = vpack.c.b16 %v828, %v826
    %v959 = vpack.c.b16 %v829, %v827
    %v960 = vpack.c.b16 %v832, %v830
    %v961 = vpack.c.b16 %v833, %v831
    %v962 = vpack.c.b16 %v836, %v834
    %v963 = vpack.c.b16 %v837, %v835
    %v964 = vpack.c.b16 %v840, %v838
    %v965 = vpack.c.b16 %v841, %v839
    %v966 = vpack.c.b16 %v844, %v842
    %v967 = vpack.c.b16 %v845, %v843
    %v968 = vpack.c.b16 %v848, %v846
    %v969 = vpack.c.b16 %v849, %v847
    %v970 = vpack.c.b16 %v852, %v850
    %v971 = vpack.c.b16 %v853, %v851
    %v972 = vpack.c.b16 %v856, %v854
    %v973 = vpack.c.b16 %v857, %v855
    %v974 = vpack.c.b16 %v860, %v858
    %v975 = vpack.c.b16 %v861, %v859
    %v976 = vpack.c.b16 %v864, %v862
    %v977 = vpack.c.b16 %v865, %v863
    %v978 = vpack.c.b16 %v868, %v866
    %v979 = vpack.c.b16 %v869, %v867
    %v980 = vpack.c.b16 %v872, %v870
    %v981 = vpack.c.b16 %v873, %v871
    %v982 = vpack.c.b16 %v876, %v874
    %v983 = vpack.c.b16 %v877, %v875
    %v984 = vpack.c.b16 %v880, %v878
    %v985 = vpack.c.b16 %v881, %v879
    %v986 = vpack.c.b16 %v884, %v882
    %v987 = vpack.c.b16 %v885, %v883
    %v988 = vpack.c.b16 %v888, %v886
    %v989 = vpack.c.b16 %v889, %v887
    %v990 = vpack.c.b16 %v892, %v890
    %v991 = vpack.c.b16 %v893, %v891
    %v992 = vpack.c.b16 %v896, %v894
    %v993 = vpack.c.b16 %v897, %v895
    %1090 = vmatprep.subr.bf16.mxu0 %v913
    %1091 = vmatpush1.bf16.msra.mxu0 %v912
    %1092 = vmatprep.subr.bf16.mxu0 %v911
    %1093 = vmatpush1.bf16.msra.mxu0 %v910
    %1094 = vmatprep.subr.bf16.mxu0 %v909
    %1095 = vmatpush1.bf16.msra.mxu0 %v908
    %1096 = vmatprep.subr.bf16.mxu0 %v907
    %1097 = vmatpush1.bf16.msra.mxu0 %v906
    %1098 = vmatprep.subr.bf16.mxu0 %v905
    %1099 = vmatpush1.bf16.msra.mxu0 %v904
    %1100 = vmatprep.subr.bf16.mxu0 %v903
    %1101 = vmatpush1.bf16.msra.mxu0 %v902
    %1102 = vmatprep.subr.bf16.mxu0 %v901
    %1103 = vmatpush1.bf16.msra.mxu0 %v900
    %1104 = vmatprep.subr.bf16.mxu0 %v899
    %1105 = vmatpush1.bf16.msra.mxu0 %v898
    %1106 = vmatprep.subr.bf16.mxu0 %v929
    %1107 = vmatpush2.bf16.msra.mxu0 %v928
    %1108 = vmatprep.subr.bf16.mxu0 %v927
    %1109 = vmatpush2.bf16.msra.mxu0 %v926
    %1110 = vmatprep.subr.bf16.mxu0 %v925
    %1111 = vmatpush2.bf16.msra.mxu0 %v924
    %1112 = vmatprep.subr.bf16.mxu0 %v923
    %1113 = vmatpush2.bf16.msra.mxu0 %v922
    %1114 = vmatprep.subr.bf16.mxu0 %v921
    %1115 = vmatpush2.bf16.msra.mxu0 %v920
    %1116 = vmatprep.subr.bf16.mxu0 %v919
    %1117 = vmatpush2.bf16.msra.mxu0 %v918
    %1118 = vmatprep.subr.bf16.mxu0 %v917
    %1119 = vmatpush2.bf16.msra.mxu0 %v916
    %1120 = vmatprep.subr.bf16.mxu0 %v915
    %1121 = vmatpush2.bf16.msra.mxu0 %v914
    %1122 = vmatprep.mubr.bf16.mxu0 %v497
    %1123 = vmatmul.mubr.bf16.gmra.mxu0 %v496
    %v1124 = vpop.f32.mrf.mxu0
    %v1125 = vadd.f32 %v603, %v1124
    %v1126 = vpop.f32.mrf.mxu0
    %v1127 = vadd.f32 %v607, %v1126
    %v1128 = vpop.f32.mrf.mxu0
    %v1129 = vpop.f32.mrf.mxu0
    %1130 = vdwg.mxu0
    %1131 = vmatprep.subr.bf16.mxu0 %v945
    %1132 = vmatpush1.bf16.msra.mxu0 %v944
    %1133 = vmatprep.subr.bf16.mxu0 %v943
    %1134 = vmatpush1.bf16.msra.mxu0 %v942
    %1135 = vmatprep.subr.bf16.mxu0 %v941
    %1136 = vmatpush1.bf16.msra.mxu0 %v940
    %1137 = vmatprep.subr.bf16.mxu0 %v939
    %1138 = vmatpush1.bf16.msra.mxu0 %v938
    %1139 = vmatprep.subr.bf16.mxu0 %v937
    %1140 = vmatpush1.bf16.msra.mxu0 %v936
    %1141 = vmatprep.subr.bf16.mxu0 %v935
    %1142 = vmatpush1.bf16.msra.mxu0 %v934
    %1143 = vmatprep.subr.bf16.mxu0 %v933
    %1144 = vmatpush1.bf16.msra.mxu0 %v932
    %1145 = vmatprep.subr.bf16.mxu0 %v931
    %1146 = vmatpush1.bf16.msra.mxu0 %v930
    %1147 = vmatprep.subr.bf16.mxu0 %v961
    %1148 = vmatpush2.bf16.msra.mxu0 %v960
    %1149 = vmatprep.subr.bf16.mxu0 %v959
    %1150 = vmatpush2.bf16.msra.mxu0 %v958
    %1151 = vmatprep.subr.bf16.mxu0 %v957
    %1152 = vmatpush2.bf16.msra.mxu0 %v956
    %1153 = vmatprep.subr.bf16.mxu0 %v955
    %1154 = vmatpush2.bf16.msra.mxu0 %v954
    %1155 = vmatprep.subr.bf16.mxu0 %v953
    %1156 = vmatpush2.bf16.msra.mxu0 %v952
    %1157 = vmatprep.subr.bf16.mxu0 %v951
    %1158 = vmatpush2.bf16.msra.mxu0 %v950
    %1159 = vmatprep.subr.bf16.mxu0 %v949
    %1160 = vmatpush2.bf16.msra.mxu0 %v948
    %1161 = vmatprep.subr.bf16.mxu0 %v947
    %1162 = vmatpush2.bf16.msra.mxu0 %v946
    %1163 = vmatprep.mubr.bf16.mxu0 %v499
    %1164 = vmatmul.mubr.bf16.gmra.mxu0 %v498
    %v1165 = vpop.f32.mrf.mxu0
    %v1166 = vadd.f32 %v1125, %v1165
    %v1167 = vpop.f32.mrf.mxu0
    %v1168 = vadd.f32 %v1127, %v1167
    %v1169 = vpop.f32.mrf.mxu0
    %v1170 = vpop.f32.mrf.mxu0
    %1171 = vdwg.mxu0
    %1172 = vmatprep.subr.bf16.mxu0 %v977
    %1173 = vmatpush1.bf16.msra.mxu0 %v976
    %1174 = vmatprep.subr.bf16.mxu0 %v975
    %1175 = vmatpush1.bf16.msra.mxu0 %v974
    %1176 = vmatprep.subr.bf16.mxu0 %v973
    %1177 = vmatpush1.bf16.msra.mxu0 %v972
    %1178 = vmatprep.subr.bf16.mxu0 %v971
    %1179 = vmatpush1.bf16.msra.mxu0 %v970
    %1180 = vmatprep.subr.bf16.mxu0 %v969
    %1181 = vmatpush1.bf16.msra.mxu0 %v968
    %1182 = vmatprep.subr.bf16.mxu0 %v967
    %1183 = vmatpush1.bf16.msra.mxu0 %v966
    %1184 = vmatprep.subr.bf16.mxu0 %v965
    %1185 = vmatpush1.bf16.msra.mxu0 %v964
    %1186 = vmatprep.subr.bf16.mxu0 %v963
    %1187 = vmatpush1.bf16.msra.mxu0 %v962
    %1188 = vmatprep.subr.bf16.mxu0 %v993
    %1189 = vmatpush2.bf16.msra.mxu0 %v992
    %1190 = vmatprep.subr.bf16.mxu0 %v991
    %1191 = vmatpush2.bf16.msra.mxu0 %v990
    %1192 = vmatprep.subr.bf16.mxu0 %v989
    %1193 = vmatpush2.bf16.msra.mxu0 %v988
    %1194 = vmatprep.subr.bf16.mxu0 %v987
    %1195 = vmatpush2.bf16.msra.mxu0 %v986
    %1196 = vmatprep.subr.bf16.mxu0 %v985
    %1197 = vmatpush2.bf16.msra.mxu0 %v984
    %1198 = vmatprep.subr.bf16.mxu0 %v983
    %1199 = vmatpush2.bf16.msra.mxu0 %v982
    %1200 = vmatprep.subr.bf16.mxu0 %v981
    %1201 = vmatpush2.bf16.msra.mxu0 %v980
    %1202 = vmatprep.subr.bf16.mxu0 %v979
    %1203 = vmatpush2.bf16.msra.mxu0 %v978
    %1204 = vmatprep.mubr.bf16.mxu0 %v501
    %1205 = vmatmul.mubr.bf16.gmra.mxu0 %v500
    %v1206 = vpop.f32.mrf.mxu0
    %v1207 = vadd.f32 %v1166, %v1206
    %v1208 = vpop.f32.mrf.mxu0
    %v1209 = vadd.f32 %v1168, %v1208
    %v1210 = vpop.f32.mrf.mxu0
    %v1211 = vpop.f32.mrf.mxu0
    %1212 = vdwg.mxu0
    %v1213 = vmax.f32 %v1207, 0.0
    %v1214 = vmax.f32 %v1209, 0.0
    %v1215 = vpack.c.bf16 %v1213, %v1213
    %v1216 = vpack.c.bf16 %v1214, %v1214
    %v1217 = vld [vmem:[#allocation8] sm:$0xf]
    %v1218 = vld [vmem:[#allocation8 + $0x4] sm:$0xf]
    %v1219 = vld [vmem:[#allocation8 + $0x8] sm:$0xf]
    %v1220 = vld [vmem:[#allocation8 + $0xc] sm:$0xf]
    %v1221 = vld [vmem:[#allocation8 + $0x10] sm:$0xf]
    %v1222 = vld [vmem:[#allocation8 + $0x14] sm:$0xf]
    %v1223 = vld [vmem:[#allocation8 + $0x18] sm:$0xf]
    %v1224 = vld [vmem:[#allocation8 + $0x1c] sm:$0xf]
    %v1225 = vld [vmem:[#allocation8 + $0x20] sm:$0xf]
    %v1226 = vld [vmem:[#allocation8 + $0x24] sm:$0xf]
    %v1227 = vld [vmem:[#allocation8 + $0x28] sm:$0xf]
    %v1228 = vld [vmem:[#allocation8 + $0x2c] sm:$0xf]
    %v1229 = vld [vmem:[#allocation8 + $0x30] sm:$0xf]
    %v1230 = vld [vmem:[#allocation8 + $0x34] sm:$0xf]
    %v1231 = vld [vmem:[#allocation8 + $0x38] sm:$0xf]
    %v1232 = vld [vmem:[#allocation8 + $0x3c] sm:$0xf]
    %v1233 = vld [vmem:[#allocation8 + $0x40] sm:$0xf]
    %v1234 = vld [vmem:[#allocation8 + $0x44] sm:$0xf]
    %v1235 = vld [vmem:[#allocation8 + $0x48] sm:$0xf]
    %v1236 = vld [vmem:[#allocation8 + $0x4c] sm:$0xf]
    %v1237 = vld [vmem:[#allocation8 + $0x50] sm:$0xf]
    %v1238 = vld [vmem:[#allocation8 + $0x54] sm:$0xf]
    %v1239 = vld [vmem:[#allocation8 + $0x58] sm:$0xf]
    %v1240 = vld [vmem:[#allocation8 + $0x5c] sm:$0xf]
    %v1241 = vld [vmem:[#allocation8 + $0x60] sm:$0xf]
    %v1242 = vld [vmem:[#allocation8 + $0x64] sm:$0xf]
    %v1243 = vld [vmem:[#allocation8 + $0x68] sm:$0xf]
    %v1244 = vld [vmem:[#allocation8 + $0x6c] sm:$0xf]
    %v1245 = vld [vmem:[#allocation8 + $0x70] sm:$0xf]
    %v1246 = vld [vmem:[#allocation8 + $0x74] sm:$0xf]
    %v1247 = vld [vmem:[#allocation8 + $0x78] sm:$0xf]
    %v1248 = vld [vmem:[#allocation8 + $0x7c] sm:$0xf]
    %v1249 = vld [vmem:[%s5] sm:$0x1]
    %v1251 = vlaneseq
    %v1252 = vshrl.u32 %v1251, 7
    %v1253 = vsub.s32 0, %v1252
    %v1254 = vrot.slane %v1249, %v1253
    %v1288 = vunpack.c.l.b16 %v1217
    %v1289 = vunpack.c.l.b16 %v1218
    %v1290 = vunpack.c.l.b16 %v1219
    %v1291 = vunpack.c.l.b16 %v1220
    %v1292 = vunpack.c.l.b16 %v1221
    %v1293 = vunpack.c.l.b16 %v1222
    %v1294 = vunpack.c.l.b16 %v1223
    %v1295 = vunpack.c.l.b16 %v1224
    %v1296 = vunpack.c.l.b16 %v1225
    %v1297 = vunpack.c.l.b16 %v1226
    %v1298 = vunpack.c.l.b16 %v1227
    %v1299 = vunpack.c.l.b16 %v1228
    %v1300 = vunpack.c.l.b16 %v1229
    %v1301 = vunpack.c.l.b16 %v1230
    %v1302 = vunpack.c.l.b16 %v1231
    %v1303 = vunpack.c.l.b16 %v1232
    %v1304 = vunpack.c.l.b16 %v1233
    %v1305 = vunpack.c.l.b16 %v1234
    %v1306 = vunpack.c.l.b16 %v1235
    %v1307 = vunpack.c.l.b16 %v1236
    %v1308 = vunpack.c.l.b16 %v1237
    %v1309 = vunpack.c.l.b16 %v1238
    %v1310 = vunpack.c.l.b16 %v1239
    %v1311 = vunpack.c.l.b16 %v1240
    %v1312 = vunpack.c.l.b16 %v1241
    %v1313 = vunpack.c.l.b16 %v1242
    %v1314 = vunpack.c.l.b16 %v1243
    %v1315 = vunpack.c.l.b16 %v1244
    %v1316 = vunpack.c.l.b16 %v1245
    %v1317 = vunpack.c.l.b16 %v1246
    %v1318 = vunpack.c.l.b16 %v1247
    %v1319 = vunpack.c.l.b16 %v1248
    %v1320 = vpack.c.b16 %v1289, %v1288
    %v1321 = vpack.c.b16 %v1291, %v1290
    %v1322 = vpack.c.b16 %v1293, %v1292
    %v1323 = vpack.c.b16 %v1295, %v1294
    %v1324 = vpack.c.b16 %v1297, %v1296
    %v1325 = vpack.c.b16 %v1299, %v1298
    %v1326 = vpack.c.b16 %v1301, %v1300
    %v1327 = vpack.c.b16 %v1303, %v1302
    %v1328 = vpack.c.b16 %v1305, %v1304
    %v1329 = vpack.c.b16 %v1307, %v1306
    %v1330 = vpack.c.b16 %v1309, %v1308
    %v1331 = vpack.c.b16 %v1311, %v1310
    %v1332 = vpack.c.b16 %v1313, %v1312
    %v1333 = vpack.c.b16 %v1315, %v1314
    %v1334 = vpack.c.b16 %v1317, %v1316
    %v1335 = vpack.c.b16 %v1319, %v1318
    %1352 = vmatprep.subr.bf16.mxu0 0
    %1353 = vmatpush1.bf16.msra.mxu0 %v1327
    %1354 = vmatprep.subr.bf16.mxu0 0
    %1355 = vmatpush1.bf16.msra.mxu0 %v1326
    %1356 = vmatprep.subr.bf16.mxu0 0
    %1357 = vmatpush1.bf16.msra.mxu0 %v1325
    %1358 = vmatprep.subr.bf16.mxu0 0
    %1359 = vmatpush1.bf16.msra.mxu0 %v1324
    %1360 = vmatprep.subr.bf16.mxu0 0
    %1361 = vmatpush1.bf16.msra.mxu0 %v1323
    %1362 = vmatprep.subr.bf16.mxu0 0
    %1363 = vmatpush1.bf16.msra.mxu0 %v1322
    %1364 = vmatprep.subr.bf16.mxu0 0
    %1365 = vmatpush1.bf16.msra.mxu0 %v1321
    %1366 = vmatprep.subr.bf16.mxu0 0
    %1367 = vmatpush1.bf16.msra.mxu0 %v1320
    %1368 = vmatprep.subr.bf16.mxu0 0
    %1369 = vmatpush2.bf16.msra.mxu0 %v1335
    %1370 = vmatprep.subr.bf16.mxu0 0
    %1371 = vmatpush2.bf16.msra.mxu0 %v1334
    %1372 = vmatprep.subr.bf16.mxu0 0
    %1373 = vmatpush2.bf16.msra.mxu0 %v1333
    %1374 = vmatprep.subr.bf16.mxu0 0
    %1375 = vmatpush2.bf16.msra.mxu0 %v1332
    %1376 = vmatprep.subr.bf16.mxu0 0
    %1377 = vmatpush2.bf16.msra.mxu0 %v1331
    %1378 = vmatprep.subr.bf16.mxu0 0
    %1379 = vmatpush2.bf16.msra.mxu0 %v1330
    %1380 = vmatprep.subr.bf16.mxu0 0
    %1381 = vmatpush2.bf16.msra.mxu0 %v1329
    %1382 = vmatprep.subr.bf16.mxu0 0
    %1383 = vmatpush2.bf16.msra.mxu0 %v1328
    %1384 = vmatprep.mubr.bf16.mxu0 %v1216
    %1385 = vmatmul.mubr.bf16.gmra.mxu0 %v1215
    %v1386 = vpop.f32.mrf.mxu0
    %v1387 = vadd.f32 %v1254, %v1386
    %v1388 = vpop.f32.mrf.mxu0
    %v1389 = vpop.f32.mrf.mxu0
    %v1390 = vpop.f32.mrf.mxu0
    %1391 = vdwg.mxu0
    %1392 = vmax.xlane.f32.xlu0 %v1387
    %v1393 = vpop.xlane.xlu0 %1392
    %v1394 = vsub.f32 %v1387, %v1393
    %v1395 = vmul.f32 %v1394, 1.442695
    %v1396 = vpow.pop %v1395
    %1397 = vadd.xlane.f32.xlu0 %v1396
    %v1398 = vpop.xlane.xlu0 %1397
    %v1399 = vrcp.pop %v1398
    %v1400 = vmul.f32 %v1396, %v1399
    %1401 = vst [vmem:[#allocation10] sm:$0xff] %v1400
    // Predicated region
    $region42: #{tpu_custom_call.1} parent=1 // pred_check
      _
    $region43: #{tpu_custom_call.1} parent=1 // pred_check_branch
      %1403 = sbr.rel (0) target = $region45
    $region44: #{tpu_custom_call.1} parent=1 // pred_region
      %s1405 = ssub.s32 128, 128
      %1406 = vsyncadd [#allocation4], %s1405
      %s1408 = sshll.u32 [#allocation10], 4
      %s1409 = int_to_ptr.vmem [resolvable:$true] %s1408
      %1411 = dma.vmem_to_hbm [thread:$0]  %s1409, 128, %s6, [#allocation4]
    $region45: #{tpu_custom_call.1} parent=1 // pred_fallthru
      _
    // Predicated region
    $region46: #{tpu_custom_call.1} parent=1 // pred_check
      _
    $region47: #{tpu_custom_call.1} parent=1 // pred_check_branch
      %1413 = sbr.rel (0) target = $region49
    $region48: #{tpu_custom_call.1} parent=1 // pred_region
      %1414 = dma.done [#allocation4], 128
    $region49: #{tpu_custom_call.1} parent=1 // pred_fallthru
      _
    %1415 = vsyncpa [#allocation3], 1
    %1416 = vsyncpa [#allocation6], 1
    %1417 = vsyncpa [#allocation9], 1
    %1418 = vsyncpa [#allocation4], 1

</llo_original>
